<compile_context>
chip_gen: v5e
topology: v5e:2x2
jax: 0.10.0
libtpu: 0.0.40
codegen_flags: <defaults>
</compile_context>

<pallas_src>
import jax
import jax.numpy as jnp
from jax.experimental import pallas as pl
from jax.experimental.pallas import tpu as pltpu


LANE = 128


def _silu(x):
    return x * jax.nn.sigmoid(x)


def _round_up(x, m):
    return (x + m - 1) // m * m


def _pad_to(a, shape):
    pads = [(0, t - s) for s, t in zip(a.shape, shape)]
    return jnp.pad(a, pads)


def isic_forward_kernel(
    x_ref,                       # (TB, C, THW) image tile (spatial flattened)
    xmeta_ref,                   # (TB, M)      meta features
    img_w_ref, img_b_ref,        # composed GAP->backbone->fea16: (C, 16), (1, 16)
    m1_w_ref, m1_b_ref,          # meta block 1 (BN folded in)
    m2_w_ref, m2_b_ref,          # meta block 2 (BN folded in)
    m3_w_ref, m3_b_ref,          # meta block 3 (BN folded in, cols padded to 128)
    fc_wi_ref, fc_wm_ref, fc_b_ref,   # myfc split/padded: (16,Op),(D2p,Op),(1,Op)
    out_ref,                     # (TB, Op)   sigmoid(logits), lane-dense
    meta_out_ref,                # (TB, D2p)  meta branch output, lane-dense
    pool_acc,                    # VMEM (TB, C) f32: streaming spatial sums
):
    f32 = jnp.float32
    k = pl.program_id(1)

    @pl.when(k == 0)
    def _():
        pool_acc[...] = jnp.zeros_like(pool_acc)

    # ---- streaming global-average-pool: accumulate per-channel spatial sums ----
    pool_acc[...] += jnp.sum(x_ref[...].astype(f32), axis=-1)      # (TB, C)

    @pl.when(k == pl.num_programs(1) - 1)
    def _():
        pooled = pool_acc[...]                                     # (TB, C) sums
        TB, C = pooled.shape
        N16 = img_w_ref.shape[1]

        # ---- image branch: backbone stand-in + fea16 composed into one small
        #      (C, 16) projection; 1/HW already folded into img_w/img_b.
        #      K=C (=3) contraction -> VPU FMAs, keep the MXU slot free. ----
        # TODO(synk): real timm backbone not reproducible here; GAP + Linear.
        x16 = jnp.broadcast_to(img_b_ref[...].astype(f32), (TB, N16))
        if C <= 8:
            for c in range(C):
                x16 = x16 + pooled[:, c:c + 1] * img_w_ref[c:c + 1, :]
        else:
            x16 = x16 + jnp.dot(pooled, img_w_ref[...],
                                preferred_element_type=f32)

        # ---- meta MLP: (Linear+foldedBN -> SiLU) x 3 ; Dropout(0.3) = id ----
        h = xmeta_ref[...].astype(f32)
        h = _silu(jnp.dot(h, m1_w_ref[...], preferred_element_type=f32)
                  + m1_b_ref[...])
        h = _silu(jnp.dot(h, m2_w_ref[...], preferred_element_type=f32)
                  + m2_b_ref[...])
        h = _silu(jnp.dot(h, m3_w_ref[...], preferred_element_type=f32)
                  + m3_b_ref[...])                                  # (TB, D2p)
        meta_out_ref[...] = h

        # ---- myfc over cat(x16, h): split weights, no in-kernel concat.
        #      The 5 Dropout(0.5) branches are identity at inference. ----
        logits = (jnp.dot(x16, fc_wi_ref[...], preferred_element_type=f32)
                  + jnp.dot(h, fc_wm_ref[...], preferred_element_type=f32)
                  + fc_b_ref[...])                                  # (TB, Op)
        out_ref[...] = jax.nn.sigmoid(logits)


def _choose_tiles(B, C, HW):
    """Pick batch / spatial tile sizes keeping double-buffering inside the
    v7x scoped-VMEM budget (smallest of the three generations)."""
    TB = min(128, _round_up(B, 8))
    B_pad = _round_up(B, TB)
    # Keep 2 buffers of the (TB, C, THW) f32 image tile within ~8 MiB.
    budget = 8 * (1 << 20)
    thw_max = max(LANE, (budget // (2 * TB * C * 4)) // LANE * LANE)
    THW = min(_round_up(HW, LANE), thw_max)
    HW_pad = _round_up(HW, THW)
    return TB, B_pad, THW, HW_pad


def init_params(key, *, in_ch_img=3, backbone_feat=64, n_meta=64,
                n_meta_dim=(128, 64, 32), out_dim=1):
    """Deterministic synthetic parameters (PyTorch-style uniform fan-in init).
    Linear weights stored pre-transposed (in, out); BN stored eval-folded."""
    ks = jax.random.split(key, 9)

    def lin(k, fan_in, fan_out):
        kw, kb = jax.random.split(k)
        bound = 1.0 / (fan_in ** 0.5)
        w = jax.random.uniform(kw, (fan_in, fan_out), jnp.float32, -bound, bound)
        b = jax.random.uniform(kb, (1, fan_out), jnp.float32, -bound, bound)
        return w, b

    def bn_folded(k, dim, eps=1e-5):
        k1, k2, k3, k4 = jax.random.split(k, 4)
        gamma = 1.0 + 0.1 * jax.random.normal(k1, (1, dim), jnp.float32)
        beta = 0.1 * jax.random.normal(k2, (1, dim), jnp.float32)
        running_mean = 0.1 * jax.random.normal(k3, (1, dim), jnp.float32)
        running_var = jnp.abs(jax.random.normal(k4, (1, dim), jnp.float32)) + 0.5
        scale = gamma / jnp.sqrt(running_var + eps)   # eval BN -> x*scale+shift
        shift = beta - running_mean * scale
        return scale, shift

    d0, d1, d2 = n_meta_dim
    p = {}
    p['bb_w'], p['bb_b'] = lin(ks[0], in_ch_img, backbone_feat)
    p['fea_w'], p['fea_b'] = lin(ks[1], backbone_feat, 16)
    p['m1_w'], p['m1_b'] = lin(ks[2], n_meta, d0)
    p['m1_s'], p['m1_t'] = bn_folded(ks[3], d0)
    p['m2_w'], p['m2_b'] = lin(ks[4], d0, d1)
    p['m2_s'], p['m2_t'] = bn_folded(ks[5], d1)
    p['m3_w'], p['m3_b'] = lin(ks[6], d1, d2)
    p['m3_s'], p['m3_t'] = bn_folded(ks[7], d2)
    fc_w, p['fc_b'] = lin(ks[8], 16 + d2, out_dim)    # myfc: Linear(16+D2, out)
    p['fc_wi'] = fc_w[:16]
    p['fc_wm'] = fc_w[16:]
    return p


def isic_forward(x_img, x_meta, params):
    """x_img: (B, C, H, W) NCHW float32; x_meta: (B, n_meta) float32.
    Returns (sigmoid(myfc(cat(fea16(backbone(x)), meta(x_meta)))), meta(x_meta))."""
    B, C, H, W = x_img.shape
    HW = H * W
    M = x_meta.shape[1]
    D0 = params['m1_w'].shape[1]
    D1 = params['m2_w'].shape[1]
    D2 = params['m3_w'].shape[1]
    out_dim = params['fc_b'].shape[1]
    D2p = _round_up(D2, LANE)      # lane-dense meta output width
    Op = _round_up(out_dim, LANE)  # lane-dense logit width

    TB, B_pad, THW, HW_pad = _choose_tiles(B, C, HW)

    # ---- fold + pad parameters (cheap one-time prep outside the kernel) ----
    # NOTE: on v6e/v7x these (and the image) could be fed as bf16 to halve HBM
    # bytes; kept f32 here for bit-exactness with the reference math.
    # Compose GAP-scale (1/HW) + backbone stand-in + fea16 into one (C, 16)
    # projection: x16 = (pooled/HW) @ bb_w @ fea_w + (bb_b @ fea_w + fea_b).
    img_w = (params['bb_w'] * (1.0 / HW)) @ params['fea_w']          # (C, 16)
    img_b = params['bb_b'] @ params['fea_w'] + params['fea_b']       # (1, 16)
    m1_w = params['m1_w'] * params['m1_s']
    m1_b = params['m1_b'] * params['m1_s'] + params['m1_t']
    m2_w = params['m2_w'] * params['m2_s']
    m2_b = params['m2_b'] * params['m2_s'] + params['m2_t']
    m3_w = _pad_to(params['m3_w'] * params['m3_s'], (D1, D2p))
    m3_b = _pad_to(params['m3_b'] * params['m3_s'] + params['m3_t'], (1, D2p))
    fc_wi = _pad_to(params['fc_wi'], (16, Op))
    fc_wm = _pad_to(params['fc_wm'], (D2p, Op))
    fc_b = _pad_to(params['fc_b'], (1, Op))

    # ---- pad inputs to tile multiples (zero rows/zero spatial: harmless) ----
    x_flat = _pad_to(x_img.reshape(B, C, HW), (B_pad, C, HW_pad))
    xm = _pad_to(x_meta, (B_pad, M))

    grid = (B_pad // TB, HW_pad // THW)

    def fixed(arr):                         # weights: resident across the grid
        return pl.BlockSpec(arr.shape, lambda b, k: (0, 0))

    param_arrays = [img_w, img_b, m1_w, m1_b, m2_w, m2_b, m3_w, m3_b,
                    fc_wi, fc_wm, fc_b]

    in_specs = [
        pl.BlockSpec((TB, C, THW), lambda b, k: (b, 0, k)),   # streamed image
        pl.BlockSpec((TB, M), lambda b, k: (b, 0)),           # meta per batch tile
    ] + [fixed(a) for a in param_arrays]

    out_specs = (
        pl.BlockSpec((TB, Op), lambda b, k: (b, 0)),
        pl.BlockSpec((TB, D2p), lambda b, k: (b, 0)),
    )

    param_bytes = sum(int(a.size) * 4 for a in param_arrays)

    # ---- VMEM budget: 2x (double-buffer) image tile + meta tile + params +
    #      outputs + scratch, with headroom; capped for v7x's smaller VMEM ----
    tile_bytes = (2 * TB * C * THW * 4
                  + 2 * TB * M * 4
                  + 2 * param_bytes
                  + 2 * TB * (Op + D2p) * 4
                  + TB * LANE * 4)
    vmem_limit = int(min(max(2 * tile_bytes, 16 * (1 << 20)), 48 * (1 << 20)))

    flops = (B_pad * C * HW_pad                                   # GAP adds
             + 2 * B_pad * (C * 16 + M * D0 + D0 * D1
                            + D1 * D2p + (16 + D2p) * Op))
    transcendentals = B_pad * (D0 + D1 + D2p + Op)
    bytes_accessed = (int(x_flat.size) + int(xm.size)) * 4 + param_bytes \
        + B_pad * (Op + D2p) * 4
    cost = pl.CostEstimate(flops=int(flops),
                           transcendentals=int(transcendentals),
                           bytes_accessed=int(bytes_accessed))

    out_pad, meta_pad = pl.pallas_call(
        isic_forward_kernel,
        out_shape=(jax.ShapeDtypeStruct((B_pad, Op), jnp.float32),
                   jax.ShapeDtypeStruct((B_pad, D2p), jnp.float32)),
        grid_spec=pltpu.PrefetchScalarGridSpec(
            num_scalar_prefetch=0,
            grid=grid,
            in_specs=in_specs,
            out_specs=out_specs,
            scratch_shapes=[pltpu.VMEM((TB, C), jnp.float32)],
        ),
        compiler_params=pltpu.CompilerParams(
            dimension_semantics=("parallel", "arbitrary"),
            vmem_limit_bytes=vmem_limit,
        ),
        cost_estimate=cost,
    )(x_flat, xm, *param_arrays)

    # Slice off batch padding and lane padding outside the kernel.
    return out_pad[:B, :out_dim], meta_pad[:B, :D2]


if __name__ == "__main__":
    key = jax.random.PRNGKey(0)
    k_img, k_meta, k_param = jax.random.split(key, 3)

    # Small shapes consistent with the module's forward.
    B, C, H, W = 2, 3, 16, 16
    n_meta = 64
    params = init_params(k_param, in_ch_img=C, backbone_feat=64, n_meta=n_meta,
                         n_meta_dim=(128, 64, 32), out_dim=1)

    x = jax.random.normal(k_img, (B, C, H, W), dtype=jnp.float32)
    x_meta = jax.random.normal(k_meta, (B, n_meta), dtype=jnp.float32)

    out, meta_feat = isic_forward(x, x_meta, params)
    jax.block_until_ready((out, meta_feat))
    assert out.shape == (B, 1) and meta_feat.shape == (B, 32)
    assert bool(jnp.all(jnp.isfinite(out))) and bool(jnp.all(jnp.isfinite(meta_feat)))
    print("KERNEL_OK")
</pallas_src>

<mosaic_0001>
module attributes {stable_mosaic.version = 11 : i64} {
  func.func @isic_forward_kernel(%arg0: i32, %arg1: i32, %arg2: memref<8x3x256xf32, #tpu.memory_space<vmem>>, %arg3: memref<8x64xf32, #tpu.memory_space<vmem>>, %arg4: memref<3x16xf32, #tpu.memory_space<vmem>>, %arg5: memref<1x16xf32, #tpu.memory_space<vmem>>, %arg6: memref<64x128xf32, #tpu.memory_space<vmem>>, %arg7: memref<1x128xf32, #tpu.memory_space<vmem>>, %arg8: memref<128x64xf32, #tpu.memory_space<vmem>>, %arg9: memref<1x64xf32, #tpu.memory_space<vmem>>, %arg10: memref<64x128xf32, #tpu.memory_space<vmem>>, %arg11: memref<1x128xf32, #tpu.memory_space<vmem>>, %arg12: memref<16x128xf32, #tpu.memory_space<vmem>>, %arg13: memref<128x128xf32, #tpu.memory_space<vmem>>, %arg14: memref<1x128xf32, #tpu.memory_space<vmem>>, %arg15: memref<8x128xf32, #tpu.memory_space<vmem>>, %arg16: memref<8x128xf32, #tpu.memory_space<vmem>>, %arg17: memref<8x3xf32, #tpu.memory_space<vmem>>) attributes {dimension_semantics = [#tpu.dimension_semantics<parallel>, #tpu.dimension_semantics<arbitrary>], iteration_bounds = array<i64: 1, 1>, scalar_prefetch = 0 : i64, scratch_operands = 1 : i64, tpu.core_type = #tpu.core_type<tc>, window_params = [{transform_indices = @transform_0, window_bounds = array<i64: 8, 3, 256>}, {transform_indices = @transform_1, window_bounds = array<i64: 8, 64>}, {pipeline_mode = #tpu.pipeline_mode<synchronous>, transform_indices = @transform_2, window_bounds = array<i64: 3, 16>}, {pipeline_mode = #tpu.pipeline_mode<synchronous>, transform_indices = @transform_3, window_bounds = array<i64: 1, 16>}, {pipeline_mode = #tpu.pipeline_mode<synchronous>, transform_indices = @transform_4, window_bounds = array<i64: 64, 128>}, {pipeline_mode = #tpu.pipeline_mode<synchronous>, transform_indices = @transform_5, window_bounds = array<i64: 1, 128>}, {pipeline_mode = #tpu.pipeline_mode<synchronous>, transform_indices = @transform_6, window_bounds = array<i64: 128, 64>}, {pipeline_mode = #tpu.pipeline_mode<synchronous>, transform_indices = @transform_7, window_bounds = array<i64: 1, 64>}, {pipeline_mode = #tpu.pipeline_mode<synchronous>, transform_indices = @transform_8, window_bounds = array<i64: 64, 128>}, {pipeline_mode = #tpu.pipeline_mode<synchronous>, transform_indices = @transform_9, window_bounds = array<i64: 1, 128>}, {pipeline_mode = #tpu.pipeline_mode<synchronous>, transform_indices = @transform_10, window_bounds = array<i64: 16, 128>}, {pipeline_mode = #tpu.pipeline_mode<synchronous>, transform_indices = @transform_11, window_bounds = array<i64: 128, 128>}, {pipeline_mode = #tpu.pipeline_mode<synchronous>, transform_indices = @transform_12, window_bounds = array<i64: 1, 128>}, {transform_indices = @transform_13, window_bounds = array<i64: 8, 128>}, {transform_indices = @transform_14, window_bounds = array<i64: 8, 128>}]} {
    %c0_i32 = arith.constant 0 : i32
    %0 = arith.cmpi eq, %arg1, %c0_i32 : i32
    %1 = arith.extui %0 : i1 to i32
    %c0_i32_0 = arith.constant 0 : i32
    %2 = arith.cmpi ne, %1, %c0_i32_0 : i32
    scf.if %2 {
      %cst_9 = arith.constant 0.000000e+00 : f32
      %11 = vector.broadcast %cst_9 : f32 to vector<8x3xf32>
      %c0_10 = arith.constant 0 : index
      %c0_11 = arith.constant 0 : index
      %12 = vector.load %arg17[%c0_10, %c0_11] : memref<8x3xf32, #tpu.memory_space<vmem>>, vector<8x3xf32>
      tpu.vector_store %arg17[%c0_10, %c0_11], %11 {strides = array<i32>} : memref<8x3xf32, #tpu.memory_space<vmem>>, vector<8x3xf32>,
    } else {
    }
    %c0 = arith.constant 0 : index
    %c0_1 = arith.constant 0 : index
    %3 = vector.load %arg17[%c0, %c0_1] : memref<8x3xf32, #tpu.memory_space<vmem>>, vector<8x3xf32>
    %c0_2 = arith.constant 0 : index
    %c0_3 = arith.constant 0 : index
    %c0_4 = arith.constant 0 : index
    %4 = vector.load %arg2[%c0_2, %c0_3, %c0_4] : memref<8x3x256xf32, #tpu.memory_space<vmem>>, vector<8x3x256xf32>
    %cst = arith.constant dense<0.000000e+00> : vector<8x3xf32>
    %5 = vector.multi_reduction <add>, %4, %cst [2] : vector<8x3x256xf32> to vector<8x3xf32>
    %6 = arith.addf %3, %5 : vector<8x3xf32>
    %c0_5 = arith.constant 0 : index
    %c0_6 = arith.constant 0 : index
    %7 = vector.load %arg17[%c0_5, %c0_6] : memref<8x3xf32, #tpu.memory_space<vmem>>, vector<8x3xf32>
    tpu.vector_store %arg17[%c0_5, %c0_6], %6 {strides = array<i32>} : memref<8x3xf32, #tpu.memory_space<vmem>>, vector<8x3xf32>,
    %c0_i32_7 = arith.constant 0 : i32
    %8 = arith.cmpi eq, %arg1, %c0_i32_7 : i32
    %9 = arith.extui %8 : i1 to i32
    %c0_i32_8 = arith.constant 0 : i32
    %10 = arith.cmpi ne, %9, %c0_i32_8 : i32
    scf.if %10 {
      %c0_9 = arith.constant 0 : index
      %c0_10 = arith.constant 0 : index
      %11 = vector.load %arg17[%c0_9, %c0_10] : memref<8x3xf32, #tpu.memory_space<vmem>>, vector<8x3xf32>
      %c0_11 = arith.constant 0 : index
      %c0_12 = arith.constant 0 : index
      %12 = vector.load %arg5[%c0_11, %c0_12] : memref<1x16xf32, #tpu.memory_space<vmem>>, vector<1x16xf32>
      %13 = vector.shape_cast %12 : vector<1x16xf32> to vector<1x16xf32>
      %14 = vector.broadcast %13 : vector<1x16xf32> to vector<8x16xf32>
      %15 = vector.extract_strided_slice %11 {offsets = [0, 0], sizes = [8, 1], strides = [1, 1]} : vector<8x3xf32> to vector<8x1xf32>
      %c0_13 = arith.constant 0 : index
      %c0_14 = arith.constant 0 : index
      %16 = vector.load %arg4[%c0_13, %c0_14] : memref<3x16xf32, #tpu.memory_space<vmem>>, vector<1x16xf32>
      %17 = vector.broadcast %15 : vector<8x1xf32> to vector<8x16xf32>
      %18 = vector.broadcast %16 : vector<1x16xf32> to vector<8x16xf32>
      %19 = arith.mulf %17, %18 : vector<8x16xf32>
      %20 = arith.addf %14, %19 : vector<8x16xf32>
      %21 = vector.extract_strided_slice %11 {offsets = [0, 1], sizes = [8, 1], strides = [1, 1]} : vector<8x3xf32> to vector<8x1xf32>
      %c1 = arith.constant 1 : index
      %c0_15 = arith.constant 0 : index
      %22 = vector.load %arg4[%c1, %c0_15] : memref<3x16xf32, #tpu.memory_space<vmem>>, vector<1x16xf32>
      %23 = vector.broadcast %21 : vector<8x1xf32> to vector<8x16xf32>
      %24 = vector.broadcast %22 : vector<1x16xf32> to vector<8x16xf32>
      %25 = arith.mulf %23, %24 : vector<8x16xf32>
      %26 = arith.addf %20, %25 : vector<8x16xf32>
      %27 = vector.extract_strided_slice %11 {offsets = [0, 2], sizes = [8, 1], strides = [1, 1]} : vector<8x3xf32> to vector<8x1xf32>
      %c2 = arith.constant 2 : index
      %c0_16 = arith.constant 0 : index
      %28 = vector.load %arg4[%c2, %c0_16] : memref<3x16xf32, #tpu.memory_space<vmem>>, vector<1x16xf32>
      %29 = vector.broadcast %27 : vector<8x1xf32> to vector<8x16xf32>
      %30 = vector.broadcast %28 : vector<1x16xf32> to vector<8x16xf32>
      %31 = arith.mulf %29, %30 : vector<8x16xf32>
      %32 = arith.addf %26, %31 : vector<8x16xf32>
      %c0_17 = arith.constant 0 : index
      %c0_18 = arith.constant 0 : index
      %33 = vector.load %arg3[%c0_17, %c0_18] : memref<8x64xf32, #tpu.memory_space<vmem>>, vector<8x64xf32>
      %c0_19 = arith.constant 0 : index
      %c0_20 = arith.constant 0 : index
      %34 = vector.load %arg6[%c0_19, %c0_20] : memref<64x128xf32, #tpu.memory_space<vmem>>, vector<64x128xf32>
      %cst_21 = arith.constant dense<0.000000e+00> : vector<8x128xf32>
      %35 = tpu.matmul %33, %34, %cst_21 {dimension_numbers = #tpu.dot_dimension_numbers<[1], [0], [0], [1], [0, 0, 1, 1], [], []>} : vector<8x64xf32>, vector<64x128xf32>, vector<8x128xf32> -> vector<8x128xf32>
      %c0_22 = arith.constant 0 : index
      %c0_23 = arith.constant 0 : index
      %36 = vector.load %arg7[%c0_22, %c0_23] : memref<1x128xf32, #tpu.memory_space<vmem>>, vector<1x128xf32>
      %37 = vector.broadcast %36 : vector<1x128xf32> to vector<8x128xf32>
      %38 = arith.addf %35, %37 : vector<8x128xf32>
      %39 = arith.negf %38 : vector<8x128xf32>
      %40 = math.exp %39 : vector<8x128xf32>
      %cst_24 = arith.constant 1.000000e+00 : f32
      %41 = vector.broadcast %cst_24 : f32 to vector<8x128xf32>
      %42 = arith.addf %41, %40 : vector<8x128xf32>
      %43 = arith.divf %41, %42 : vector<8x128xf32>
      %44 = arith.mulf %38, %43 : vector<8x128xf32>
      %c0_25 = arith.constant 0 : index
      %c0_26 = arith.constant 0 : index
      %45 = vector.load %arg8[%c0_25, %c0_26] : memref<128x64xf32, #tpu.memory_space<vmem>>, vector<128x64xf32>
      %cst_27 = arith.constant dense<0.000000e+00> : vector<8x64xf32>
      %46 = tpu.matmul %44, %45, %cst_27 {dimension_numbers = #tpu.dot_dimension_numbers<[1], [0], [0], [1], [0, 0, 1, 1], [], []>} : vector<8x128xf32>, vector<128x64xf32>, vector<8x64xf32> -> vector<8x64xf32>
      %c0_28 = arith.constant 0 : index
      %c0_29 = arith.constant 0 : index
      %47 = vector.load %arg9[%c0_28, %c0_29] : memref<1x64xf32, #tpu.memory_space<vmem>>, vector<1x64xf32>
      %48 = vector.broadcast %47 : vector<1x64xf32> to vector<8x64xf32>
      %49 = arith.addf %46, %48 : vector<8x64xf32>
      %50 = arith.negf %49 : vector<8x64xf32>
      %51 = math.exp %50 : vector<8x64xf32>
      %cst_30 = arith.constant 1.000000e+00 : f32
      %52 = vector.broadcast %cst_30 : f32 to vector<8x64xf32>
      %53 = arith.addf %52, %51 : vector<8x64xf32>
      %54 = arith.divf %52, %53 : vector<8x64xf32>
      %55 = arith.mulf %49, %54 : vector<8x64xf32>
      %c0_31 = arith.constant 0 : index
      %c0_32 = arith.constant 0 : index
      %56 = vector.load %arg10[%c0_31, %c0_32] : memref<64x128xf32, #tpu.memory_space<vmem>>, vector<64x128xf32>
      %cst_33 = arith.constant dense<0.000000e+00> : vector<8x128xf32>
      %57 = tpu.matmul %55, %56, %cst_33 {dimension_numbers = #tpu.dot_dimension_numbers<[1], [0], [0], [1], [0, 0, 1, 1], [], []>} : vector<8x64xf32>, vector<64x128xf32>, vector<8x128xf32> -> vector<8x128xf32>
      %c0_34 = arith.constant 0 : index
      %c0_35 = arith.constant 0 : index
      %58 = vector.load %arg11[%c0_34, %c0_35] : memref<1x128xf32, #tpu.memory_space<vmem>>, vector<1x128xf32>
      %59 = vector.broadcast %58 : vector<1x128xf32> to vector<8x128xf32>
      %60 = arith.addf %57, %59 : vector<8x128xf32>
      %61 = arith.negf %60 : vector<8x128xf32>
      %62 = math.exp %61 : vector<8x128xf32>
      %cst_36 = arith.constant 1.000000e+00 : f32
      %63 = vector.broadcast %cst_36 : f32 to vector<8x128xf32>
      %64 = arith.addf %63, %62 : vector<8x128xf32>
      %65 = arith.divf %63, %64 : vector<8x128xf32>
      %66 = arith.mulf %60, %65 : vector<8x128xf32>
      %c0_37 = arith.constant 0 : index
      %c0_38 = arith.constant 0 : index
      %67 = vector.load %arg16[%c0_37, %c0_38] : memref<8x128xf32, #tpu.memory_space<vmem>>, vector<8x128xf32>
      tpu.vector_store %arg16[%c0_37, %c0_38], %66 {strides = array<i32>} : memref<8x128xf32, #tpu.memory_space<vmem>>, vector<8x128xf32>,
      %c0_39 = arith.constant 0 : index
      %c0_40 = arith.constant 0 : index
      %68 = vector.load %arg12[%c0_39, %c0_40] : memref<16x128xf32, #tpu.memory_space<vmem>>, vector<16x128xf32>
      %cst_41 = arith.constant dense<0.000000e+00> : vector<8x128xf32>
      %69 = tpu.matmul %32, %68, %cst_41 {dimension_numbers = #tpu.dot_dimension_numbers<[1], [0], [0], [1], [0, 0, 1, 1], [], []>} : vector<8x16xf32>, vector<16x128xf32>, vector<8x128xf32> -> vector<8x128xf32>
      %c0_42 = arith.constant 0 : index
      %c0_43 = arith.constant 0 : index
      %70 = vector.load %arg13[%c0_42, %c0_43] : memref<128x128xf32, #tpu.memory_space<vmem>>, vector<128x128xf32>
      %cst_44 = arith.constant dense<0.000000e+00> : vector<8x128xf32>
      %71 = tpu.matmul %66, %70, %cst_44 {dimension_numbers = #tpu.dot_dimension_numbers<[1], [0], [0], [1], [0, 0, 1, 1], [], []>} : vector<8x128xf32>, vector<128x128xf32>, vector<8x128xf32> -> vector<8x128xf32>
      %72 = arith.addf %69, %71 : vector<8x128xf32>
      %c0_45 = arith.constant 0 : index
      %c0_46 = arith.constant 0 : index
      %73 = vector.load %arg14[%c0_45, %c0_46] : memref<1x128xf32, #tpu.memory_space<vmem>>, vector<1x128xf32>
      %74 = vector.broadcast %73 : vector<1x128xf32> to vector<8x128xf32>
      %75 = arith.addf %72, %74 : vector<8x128xf32>
      %76 = arith.negf %75 : vector<8x128xf32>
      %77 = math.exp %76 : vector<8x128xf32>
      %cst_47 = arith.constant 1.000000e+00 : f32
      %78 = vector.broadcast %cst_47 : f32 to vector<8x128xf32>
      %79 = arith.addf %78, %77 : vector<8x128xf32>
      %80 = arith.divf %78, %79 : vector<8x128xf32>
      %c0_48 = arith.constant 0 : index
      %c0_49 = arith.constant 0 : index
      %81 = vector.load %arg15[%c0_48, %c0_49] : memref<8x128xf32, #tpu.memory_space<vmem>>, vector<8x128xf32>
      tpu.vector_store %arg15[%c0_48, %c0_49], %80 {strides = array<i32>} : memref<8x128xf32, #tpu.memory_space<vmem>>, vector<8x128xf32>,
    } else {
    }
    return
  }
  func.func @transform_0(%arg0: i32, %arg1: i32) -> (i32, i32, i32) {
    %c0_i32 = arith.constant 0 : i32
    %c0_i32_0 = arith.constant 0 : i32
    return %arg0, %c0_i32, %arg1 : i32, i32, i32
  }
  func.func @transform_1(%arg0: i32, %arg1: i32) -> (i32, i32) {
    %c0_i32 = arith.constant 0 : i32
    %c0_i32_0 = arith.constant 0 : i32
    return %arg0, %c0_i32 : i32, i32
  }
  func.func @transform_2(%arg0: i32, %arg1: i32) -> (i32, i32) {
    %c0_i32 = arith.constant 0 : i32
    %c0_i32_0 = arith.constant 0 : i32
    %c0_i32_1 = arith.constant 0 : i32
    return %c0_i32, %c0_i32_0 : i32, i32
  }
  func.func @transform_3(%arg0: i32, %arg1: i32) -> (i32, i32) {
    %c0_i32 = arith.constant 0 : i32
    %c0_i32_0 = arith.constant 0 : i32
    %c0_i32_1 = arith.constant 0 : i32
    return %c0_i32, %c0_i32_0 : i32, i32
  }
  func.func @transform_4(%arg0: i32, %arg1: i32) -> (i32, i32) {
    %c0_i32 = arith.constant 0 : i32
    %c0_i32_0 = arith.constant 0 : i32
    %c0_i32_1 = arith.constant 0 : i32
    return %c0_i32, %c0_i32_0 : i32, i32
  }
  func.func @transform_5(%arg0: i32, %arg1: i32) -> (i32, i32) {
    %c0_i32 = arith.constant 0 : i32
    %c0_i32_0 = arith.constant 0 : i32
    %c0_i32_1 = arith.constant 0 : i32
    return %c0_i32, %c0_i32_0 : i32, i32
  }
  func.func @transform_6(%arg0: i32, %arg1: i32) -> (i32, i32) {
    %c0_i32 = arith.constant 0 : i32
    %c0_i32_0 = arith.constant 0 : i32
    %c0_i32_1 = arith.constant 0 : i32
    return %c0_i32, %c0_i32_0 : i32, i32
  }
  func.func @transform_7(%arg0: i32, %arg1: i32) -> (i32, i32) {
    %c0_i32 = arith.constant 0 : i32
    %c0_i32_0 = arith.constant 0 : i32
    %c0_i32_1 = arith.constant 0 : i32
    return %c0_i32, %c0_i32_0 : i32, i32
  }
  func.func @transform_8(%arg0: i32, %arg1: i32) -> (i32, i32) {
    %c0_i32 = arith.constant 0 : i32
    %c0_i32_0 = arith.constant 0 : i32
    %c0_i32_1 = arith.constant 0 : i32
    return %c0_i32, %c0_i32_0 : i32, i32
  }
  func.func @transform_9(%arg0: i32, %arg1: i32) -> (i32, i32) {
    %c0_i32 = arith.constant 0 : i32
    %c0_i32_0 = arith.constant 0 : i32
    %c0_i32_1 = arith.constant 0 : i32
    return %c0_i32, %c0_i32_0 : i32, i32
  }
  func.func @transform_10(%arg0: i32, %arg1: i32) -> (i32, i32) {
    %c0_i32 = arith.constant 0 : i32
    %c0_i32_0 = arith.constant 0 : i32
    %c0_i32_1 = arith.constant 0 : i32
    return %c0_i32, %c0_i32_0 : i32, i32
  }
  func.func @transform_11(%arg0: i32, %arg1: i32) -> (i32, i32) {
    %c0_i32 = arith.constant 0 : i32
    %c0_i32_0 = arith.constant 0 : i32
    %c0_i32_1 = arith.constant 0 : i32
    return %c0_i32, %c0_i32_0 : i32, i32
  }
  func.func @transform_12(%arg0: i32, %arg1: i32) -> (i32, i32) {
    %c0_i32 = arith.constant 0 : i32
    %c0_i32_0 = arith.constant 0 : i32
    %c0_i32_1 = arith.constant 0 : i32
    return %c0_i32, %c0_i32_0 : i32, i32
  }
  func.func @transform_13(%arg0: i32, %arg1: i32) -> (i32, i32) {
    %c0_i32 = arith.constant 0 : i32
    %c0_i32_0 = arith.constant 0 : i32
    return %arg0, %c0_i32 : i32, i32
  }
  func.func @transform_14(%arg0: i32, %arg1: i32) -> (i32, i32) {
    %c0_i32 = arith.constant 0 : i32
    %c0_i32_0 = arith.constant 0 : i32
    return %arg0, %c0_i32 : i32, i32
  }
}

</mosaic_0001>

<llo_original>
// kernel: tpu_custom_call.1
$region0: #{tpu_custom_call.1}
  #allocation0 [shape = 'u32[]', space=smem, size = 0x4, offset = 0x4, fixed_abs, tag = 'smem constant byte address 0x4 - core index']
  #allocation1 [shape = 'u32[72,128]{1,0:T(1,128)}', space=vmem, size = 0x9000, scoped, tag = 'internal scratch']
  #allocation2 [shape = 'f32[8,3]{1,0:T(8,128)}', space=vmem, size = 0x1000, scoped, tag = 'scratch operand']
  %s0 = inlined_call_operand.vmem [shape: f32[8,3,256], index: 0, kind: input, shape index: {}]
  %s1 = inlined_call_operand.vmem [shape: f32[8,64], index: 1, kind: input, shape index: {}]
  %s2 = inlined_call_operand.vmem [shape: f32[3,16], index: 2, kind: input, shape index: {}]
  %s3 = inlined_call_operand.vmem [shape: f32[1,16], index: 3, kind: input, shape index: {}]
  %s4 = inlined_call_operand.vmem [shape: f32[64,128], index: 4, kind: input, shape index: {}]
  %s5 = inlined_call_operand.vmem [shape: f32[1,128], index: 5, kind: input, shape index: {}]
  %s6 = inlined_call_operand.vmem [shape: f32[128,64], index: 6, kind: input, shape index: {}]
  %s7 = inlined_call_operand.vmem [shape: f32[1,64], index: 7, kind: input, shape index: {}]
  %s8 = inlined_call_operand.vmem [shape: f32[64,128], index: 8, kind: input, shape index: {}]
  %s9 = inlined_call_operand.vmem [shape: f32[1,128], index: 9, kind: input, shape index: {}]
  %s10 = inlined_call_operand.vmem [shape: f32[16,128], index: 10, kind: input, shape index: {}]
  %s11 = inlined_call_operand.vmem [shape: f32[128,128], index: 11, kind: input, shape index: {}]
  %s12 = inlined_call_operand.vmem [shape: f32[1,128], index: 12, kind: input, shape index: {}]
  %s13 = inlined_call_operand.hbm [shape: f32[8,128], index: 13, kind: output, shape index: {0}]
  %s14 = inlined_call_operand.hbm [shape: f32[8,128], index: 14, kind: output, shape index: {1}]
  %15 = xla_tuple %s13, %s14
  %s16 = sld [smem:[#allocation0]]
  $region78: #{tpu_custom_call.1} parent=0
    _
  %s18 = ssub.s32 1, %s16
  %s19 = scalar_select 0, %s18, %s16
  $region1: #{tpu_custom_call.1} parent=0
    #allocation3 [shape = 'u8[4096]{0}', space=vmem, size = 0x1000, scoped, tag = 'output window, operand 0, single buffered']
    #allocation4 [shape = 's32[1]{0}', space=sflag, size = 0x4, scoped, tag = 'scoped memory for tpu_custom_call.1']
    #allocation5 [shape = 'u8[4096]{0}', space=vmem, size = 0x1000, scoped, tag = 'output window, operand 1, single buffered']
    #allocation6 [shape = 's32[1]{0}', space=sflag, size = 0x4, scoped, tag = 'scoped memory for tpu_custom_call.1']
    %20 = vsyncpa [#allocation4], 0
    %21 = vsyncpa [#allocation6], 0
    // Predicated region
    $region2: #{tpu_custom_call.1} parent=1 // pred_check
      _
    $region3: #{tpu_custom_call.1} parent=1 // pred_check_branch
      %23 = sbr.rel (0) target = $region5
    $region4: #{tpu_custom_call.1} parent=1 // pred_region
      _
    $region5: #{tpu_custom_call.1} parent=1 // pred_fallthru
      _
    // Predicated region
    $region6: #{tpu_custom_call.1} parent=1 // pred_check
      _
    $region7: #{tpu_custom_call.1} parent=1 // pred_check_branch
      %25 = sbr.rel (0) target = $region9
    $region8: #{tpu_custom_call.1} parent=1 // pred_region
      _
    $region9: #{tpu_custom_call.1} parent=1 // pred_fallthru
      _
    // Predicated region
    $region10: #{tpu_custom_call.1} parent=1 // pred_check
      _
    $region11: #{tpu_custom_call.1} parent=1 // pred_check_branch
      %27 = sbr.rel (0) target = $region13
    $region12: #{tpu_custom_call.1} parent=1 // pred_region
      _
    $region13: #{tpu_custom_call.1} parent=1 // pred_fallthru
      _
    // Predicated region
    $region14: #{tpu_custom_call.1} parent=1 // pred_check
      _
    $region15: #{tpu_custom_call.1} parent=1 // pred_check_branch
      %29 = sbr.rel (0) target = $region17
    $region16: #{tpu_custom_call.1} parent=1 // pred_region
      _
    $region17: #{tpu_custom_call.1} parent=1 // pred_fallthru
      _
    // Predicated region
    $region18: #{tpu_custom_call.1} parent=1 // pred_check
      _
    $region19: #{tpu_custom_call.1} parent=1 // pred_check_branch
      %31 = sbr.rel (0) target = $region21
    $region20: #{tpu_custom_call.1} parent=1 // pred_region
      _
    $region21: #{tpu_custom_call.1} parent=1 // pred_fallthru
      _
    // Predicated region
    $region22: #{tpu_custom_call.1} parent=1 // pred_check
      _
    $region23: #{tpu_custom_call.1} parent=1 // pred_check_branch
      %33 = sbr.rel (0) target = $region25
    $region24: #{tpu_custom_call.1} parent=1 // pred_region
      _
    $region25: #{tpu_custom_call.1} parent=1 // pred_fallthru
      _
    // Predicated region
    $region26: #{tpu_custom_call.1} parent=1 // pred_check
      _
    $region27: #{tpu_custom_call.1} parent=1 // pred_check_branch
      %35 = sbr.rel (0) target = $region29
    $region28: #{tpu_custom_call.1} parent=1 // pred_region
      _
    $region29: #{tpu_custom_call.1} parent=1 // pred_fallthru
      _
    // Predicated region
    $region30: #{tpu_custom_call.1} parent=1 // pred_check
      _
    $region31: #{tpu_custom_call.1} parent=1 // pred_check_branch
      %37 = sbr.rel (0) target = $region33
    $region32: #{tpu_custom_call.1} parent=1 // pred_region
      _
    $region33: #{tpu_custom_call.1} parent=1 // pred_fallthru
      _
    // Predicated region
    $region34: #{tpu_custom_call.1} parent=1 // pred_check
      _
    $region35: #{tpu_custom_call.1} parent=1 // pred_check_branch
      %39 = sbr.rel (0) target = $region37
    $region36: #{tpu_custom_call.1} parent=1 // pred_region
      _
    $region37: #{tpu_custom_call.1} parent=1 // pred_fallthru
      _
    // Predicated region
    $region38: #{tpu_custom_call.1} parent=1 // pred_check
      _
    $region39: #{tpu_custom_call.1} parent=1 // pred_check_branch
      %41 = sbr.rel (0) target = $region41
    $region40: #{tpu_custom_call.1} parent=1 // pred_region
      _
    $region41: #{tpu_custom_call.1} parent=1 // pred_fallthru
      _
    // Predicated region
    $region42: #{tpu_custom_call.1} parent=1 // pred_check
      _
    $region43: #{tpu_custom_call.1} parent=1 // pred_check_branch
      %43 = sbr.rel (0) target = $region45
    $region44: #{tpu_custom_call.1} parent=1 // pred_region
      _
    $region45: #{tpu_custom_call.1} parent=1 // pred_fallthru
      _
    // Predicated region
    $region46: #{tpu_custom_call.1} parent=1 // pred_check
      _
    $region47: #{tpu_custom_call.1} parent=1 // pred_check_branch
      %45 = sbr.rel (0) target = $region49
    $region48: #{tpu_custom_call.1} parent=1 // pred_region
      _
    $region49: #{tpu_custom_call.1} parent=1 // pred_fallthru
      _
    // Predicated region
    $region50: #{tpu_custom_call.1} parent=1 // pred_check
      _
    $region51: #{tpu_custom_call.1} parent=1 // pred_check_branch
      %47 = sbr.rel (0) target = $region53
    $region52: #{tpu_custom_call.1} parent=1 // pred_region
      _
    $region53: #{tpu_custom_call.1} parent=1 // pred_fallthru
      _
    %p48 = scmp.eq.s32.totalorder 0, 0
    // Predicated region
    $region54: #{tpu_custom_call.1} parent=1 // pred_check
      %p49 = pneg %p48
    $region55: #{tpu_custom_call.1} parent=1 // pred_check_branch
      %51 = sbr.rel (%p49) target = $region57
    $region56: #{tpu_custom_call.1} parent=1 // pred_region
      %vm52 = vcmask 23552
      %53 = vst.msk [vmem:[#allocation2] sm:$0xff] %vm52, 0.0
    $region57: #{tpu_custom_call.1} parent=1 // pred_fallthru
      _
    %v54 = vld [vmem:[#allocation2] sm:$0xff]
    %v55 = vld [vmem:[%s0] sm:$0x77]
    %v56 = vld [vmem:[%s0 + $0x8] sm:$0x77]
    %v57 = vld [vmem:[%s0 + $0x10] sm:$0x77]
    %v58 = vld [vmem:[%s0 + $0x18] sm:$0x77]
    %v59 = vld [vmem:[%s0 + $0x20] sm:$0x77]
    %v60 = vld [vmem:[%s0 + $0x28] sm:$0x77]
    %v61 = vld [vmem:[%s0 + $0x30] sm:$0x77]
    %v62 = vld [vmem:[%s0 + $0x38] sm:$0x77]
    %71 = vst [vmem:[#allocation1] ss:$2 sm:$0xff] %v55
    %v72 = vld.sshfl [vmem:[#allocation1] sm:$0xff pattern:$0x75316420]
    %v73 = vld.sshfl [vmem:[#allocation1 + $0x8] sm:$0xff pattern:$0x75316420]
    %s74 = scalar_lea.vmem [#allocation1], 16
    %75 = vst [vmem:[%s74] ss:$2 sm:$0xff] %v56
    %v76 = vld.sshfl [vmem:[#allocation1 + $0x10] sm:$0xff pattern:$0x75316420]
    %v77 = vld.sshfl [vmem:[#allocation1 + $0x18] sm:$0xff pattern:$0x75316420]
    %s78 = scalar_lea.vmem [#allocation1], 32
    %79 = vst [vmem:[%s78] ss:$2 sm:$0xff] %v57
    %v80 = vld.sshfl [vmem:[#allocation1 + $0x20] sm:$0xff pattern:$0x75316420]
    %v81 = vld.sshfl [vmem:[#allocation1 + $0x28] sm:$0xff pattern:$0x75316420]
    %s82 = scalar_lea.vmem [#allocation1], 48
    %83 = vst [vmem:[%s82] ss:$2 sm:$0xff] %v58
    %v84 = vld.sshfl [vmem:[#allocation1 + $0x30] sm:$0xff pattern:$0x75316420]
    %v85 = vld.sshfl [vmem:[#allocation1 + $0x38] sm:$0xff pattern:$0x75316420]
    %86 = vst [vmem:[#allocation1] ss:$2 sm:$0xff] %v59
    %v87 = vld.sshfl [vmem:[#allocation1] sm:$0xff pattern:$0x75316420]
    %v88 = vld.sshfl [vmem:[#allocation1 + $0x8] sm:$0xff pattern:$0x75316420]
    %89 = vst [vmem:[%s74] ss:$2 sm:$0xff] %v60
    %v90 = vld.sshfl [vmem:[#allocation1 + $0x10] sm:$0xff pattern:$0x75316420]
    %v91 = vld.sshfl [vmem:[#allocation1 + $0x18] sm:$0xff pattern:$0x75316420]
    %92 = vst [vmem:[%s78] ss:$2 sm:$0xff] %v61
    %v93 = vld.sshfl [vmem:[#allocation1 + $0x20] sm:$0xff pattern:$0x75316420]
    %v94 = vld.sshfl [vmem:[#allocation1 + $0x28] sm:$0xff pattern:$0x75316420]
    %95 = vst [vmem:[%s82] ss:$2 sm:$0xff] %v62
    %v96 = vld.sshfl [vmem:[#allocation1 + $0x30] sm:$0xff pattern:$0x75316420]
    %v97 = vld.sshfl [vmem:[#allocation1 + $0x38] sm:$0xff pattern:$0x75316420]
    %vm114 = vcmask 1042432
    %v115 = vsel %vm114, %v72, 0.0
    %v116 = vsel %vm114, %v73, 0.0
    %v117 = vadd.f32 %v115, %v116
    %118 = vadd.xlane.f32.xlu0 %v117
    %v119 = vpop.xlane.xlu0 %118
    %v120 = vsel %vm114, %v76, 0.0
    %v121 = vsel %vm114, %v77, 0.0
    %v122 = vadd.f32 %v120, %v121
    %123 = vadd.xlane.f32.xlu0 %v122
    %v124 = vpop.xlane.xlu0 %123
    %v125 = vsel %vm114, %v80, 0.0
    %v126 = vsel %vm114, %v81, 0.0
    %v127 = vadd.f32 %v125, %v126
    %128 = vadd.xlane.f32.xlu0 %v127
    %v129 = vpop.xlane.xlu0 %128
    %v130 = vsel %vm114, %v84, 0.0
    %v131 = vsel %vm114, %v85, 0.0
    %v132 = vadd.f32 %v130, %v131
    %133 = vadd.xlane.f32.xlu0 %v132
    %v134 = vpop.xlane.xlu0 %133
    %v135 = vsel %vm114, %v87, 0.0
    %v136 = vsel %vm114, %v88, 0.0
    %v137 = vadd.f32 %v135, %v136
    %138 = vadd.xlane.f32.xlu0 %v137
    %v139 = vpop.xlane.xlu0 %138
    %v140 = vsel %vm114, %v90, 0.0
    %v141 = vsel %vm114, %v91, 0.0
    %v142 = vadd.f32 %v140, %v141
    %143 = vadd.xlane.f32.xlu0 %v142
    %v144 = vpop.xlane.xlu0 %143
    %v145 = vsel %vm114, %v93, 0.0
    %v146 = vsel %vm114, %v94, 0.0
    %v147 = vadd.f32 %v145, %v146
    %148 = vadd.xlane.f32.xlu0 %v147
    %v149 = vpop.xlane.xlu0 %148
    %v150 = vsel %vm114, %v96, 0.0
    %v151 = vsel %vm114, %v97, 0.0
    %v152 = vadd.f32 %v150, %v151
    %153 = vadd.xlane.f32.xlu0 %v152
    %v154 = vpop.xlane.xlu0 %153
    %v163 = vlaneseq
    %v164 = vand.u32 %v163, 127
    %v165 = vperm.slane %v119, %v164
    %v166 = vperm.slane %v124, %v164
    %v167 = vperm.slane %v129, %v164
    %v168 = vperm.slane %v134, %v164
    %v169 = vperm.slane %v139, %v164
    %v170 = vperm.slane %v144, %v164
    %v171 = vperm.slane %v149, %v164
    %v172 = vperm.slane %v154, %v164
    %vm173 = vcmask 1041409
    %v174 = vsel %vm173, %v166, %v165
    %vm175 = vcmask 1042434
    %v176 = vsel %vm175, %v167, %v174
    %vm177 = vcmask 1043459
    %v178 = vsel %vm177, %v168, %v176
    %vm179 = vcmask 1044484
    %v180 = vsel %vm179, %v169, %v178
    %vm181 = vcmask 1045509
    %v182 = vsel %vm181, %v170, %v180
    %vm183 = vcmask 1046534
    %v184 = vsel %vm183, %v171, %v182
    %vm185 = vcmask 1047559
    %v186 = vsel %vm185, %v172, %v184
    %v188 = vadd.f32 %v54, %v186
    %vm189 = vcmask 23552
    %190 = vst.msk [vmem:[#allocation2] sm:$0xff] %vm189, %v188
    // Predicated region
    $region58: #{tpu_custom_call.1} parent=1 // pred_check
      %p191 = pneg %p48
    $region59: #{tpu_custom_call.1} parent=1 // pred_check_branch
      %193 = sbr.rel (%p191) target = $region61
    $region60: #{tpu_custom_call.1} parent=1 // pred_region
      %v194 = vld [vmem:[#allocation2] sm:$0xff]
      %v195 = vld [vmem:[%s3] sm:$0x1]
      %v197 = vperm.slane %v195, 0
      %v199 = vld [vmem:[%s2] sm:$0x1]
      %201 = vset.pattern.permute.xlu0 0
      %202 = vperm.xlu0 %201, %v194
      %v203 = vpop.permute.xlu0 %202
      %v205 = vperm.slane %v199, 0
      %v206 = vmul.f32 %v203, %v205
      %v207 = vadd.f32 %v197, %v206
      %v208 = vld [vmem:[%s2 + $0x1] sm:$0x1]
      %209 = vset.pattern.permute.xlu0 1
      %210 = vperm.xlu0 %209, %v194
      %v211 = vpop.permute.xlu0 %210
      %v213 = vperm.slane %v208, 0
      %v214 = vmul.f32 %v211, %v213
      %v215 = vadd.f32 %v207, %v214
      %v216 = vld [vmem:[%s2 + $0x2] sm:$0x1]
      %217 = vset.pattern.permute.xlu0 2
      %218 = vperm.xlu0 %217, %v194
      %v219 = vpop.permute.xlu0 %218
      %v221 = vperm.slane %v216, 0
      %v222 = vmul.f32 %v219, %v221
      %v223 = vadd.f32 %v215, %v222
      %v224 = vld [vmem:[%s1] sm:$0xff]
      %v225 = vld [vmem:[%s4] sm:$0xff]
      %v226 = vld [vmem:[%s4 + $0x8] sm:$0xff]
      %v227 = vld [vmem:[%s4 + $0x10] sm:$0xff]
      %v228 = vld [vmem:[%s4 + $0x18] sm:$0xff]
      %v229 = vld [vmem:[%s4 + $0x20] sm:$0xff]
      %v230 = vld [vmem:[%s4 + $0x28] sm:$0xff]
      %v231 = vld [vmem:[%s4 + $0x30] sm:$0xff]
      %v232 = vld [vmem:[%s4 + $0x38] sm:$0xff]
      %v233 = vld [vmem:[%s5] sm:$0x1]
      %v235 = vperm.slane %v233, 0
      %vm237 = vcmask 523264
      %v239 = vsel %vm237, %v224, 0
      %241 = vmatpush.msra.mxu0 0.0
      %242 = vmatpush.msra.mxu0 0.0
      %243 = vmatpush.msra.mxu0 0.0
      %244 = vmatpush.msra.mxu0 0.0
      %245 = vmatpush.msra.mxu0 0.0
      %246 = vmatpush.msra.mxu0 0.0
      %247 = vmatpush.msra.mxu0 0.0
      %248 = vmatpush.msra.mxu0 0.0
      %249 = vmatpush.msra.mxu0 %v232
      %250 = vmatpush.msra.mxu0 %v231
      %251 = vmatpush.msra.mxu0 %v230
      %252 = vmatpush.msra.mxu0 %v229
      %253 = vmatpush.msra.mxu0 %v228
      %254 = vmatpush.msra.mxu0 %v227
      %255 = vmatpush.msra.mxu0 %v226
      %256 = vmatpush.msra.mxu0 %v225
      %257 = vmatmul.f32.gmra.mxu0 %v239
      %v258 = vpop.f32.mrf.mxu0
      %v259 = vadd.f32 %v235, %v258
      %260 = vdwg.mxu0
      %v261 = vxor.u32 %v259, 2147483648
      %v262 = vmul.f32 %v261, 1.442695
      %v263 = vpow.pop %v262
      %v264 = vadd.f32 %v263, 1.0
      %v265 = vrcp.pop %v264
      %v266 = vmul.f32 %v264, %v265
      %v267 = vsub.f32 1.0, %v266
      %v268 = vmul.f32 %v265, %v267
      %v269 = vadd.f32 %v265, %v268
      %vm270 = vweird.f32 %v264
      %vm271 = vweird.f32 %v265
      %vm272 = vmor %vm270, %vm271
      %v273 = vsel %vm272, %v265, %v269
      %v274 = vand.u32 2147483647, %v264
      %vm275 = vcmp.eq.f32.partialorder %v274, 8.507059e+37
      %v276 = vand.u32 %v264, 2147483648
      %v277 = vor.u32 1.1754944e-38, %v276
      %v278 = vsel %vm275, %v277, %v273
      %v279 = vmul.f32 1.0, %v278
      %v280 = vmul.f32 %v259, %v279
      %v281 = vld [vmem:[%s6] sm:$0xff]
      %v282 = vld [vmem:[%s6 + $0x8] sm:$0xff]
      %v283 = vld [vmem:[%s6 + $0x10] sm:$0xff]
      %v284 = vld [vmem:[%s6 + $0x18] sm:$0xff]
      %v285 = vld [vmem:[%s6 + $0x20] sm:$0xff]
      %v286 = vld [vmem:[%s6 + $0x28] sm:$0xff]
      %v287 = vld [vmem:[%s6 + $0x30] sm:$0xff]
      %v288 = vld [vmem:[%s6 + $0x38] sm:$0xff]
      %v289 = vld [vmem:[%s6 + $0x40] sm:$0xff]
      %v290 = vld [vmem:[%s6 + $0x48] sm:$0xff]
      %v291 = vld [vmem:[%s6 + $0x50] sm:$0xff]
      %v292 = vld [vmem:[%s6 + $0x58] sm:$0xff]
      %v293 = vld [vmem:[%s6 + $0x60] sm:$0xff]
      %v294 = vld [vmem:[%s6 + $0x68] sm:$0xff]
      %v295 = vld [vmem:[%s6 + $0x70] sm:$0xff]
      %v296 = vld [vmem:[%s6 + $0x78] sm:$0xff]
      %v297 = vld [vmem:[%s7] sm:$0x1]
      %v299 = vperm.slane %v297, 0
      %301 = vmatpush.msra.mxu0 %v296
      %302 = vmatpush.msra.mxu0 %v295
      %303 = vmatpush.msra.mxu0 %v294
      %304 = vmatpush.msra.mxu0 %v293
      %305 = vmatpush.msra.mxu0 %v292
      %306 = vmatpush.msra.mxu0 %v291
      %307 = vmatpush.msra.mxu0 %v290
      %308 = vmatpush.msra.mxu0 %v289
      %309 = vmatpush.msra.mxu0 %v288
      %310 = vmatpush.msra.mxu0 %v287
      %311 = vmatpush.msra.mxu0 %v286
      %312 = vmatpush.msra.mxu0 %v285
      %313 = vmatpush.msra.mxu0 %v284
      %314 = vmatpush.msra.mxu0 %v283
      %315 = vmatpush.msra.mxu0 %v282
      %316 = vmatpush.msra.mxu0 %v281
      %317 = vmatmul.f32.gmra.mxu0 %v280
      %v318 = vpop.f32.mrf.mxu0
      %v319 = vadd.f32 %v299, %v318
      %320 = vdwg.mxu0
      %v321 = vxor.u32 %v319, 2147483648
      %v322 = vmul.f32 %v321, 1.442695
      %v323 = vpow.pop %v322
      %v324 = vadd.f32 %v323, 1.0
      %v325 = vrcp.pop %v324
      %v326 = vmul.f32 %v324, %v325
      %v327 = vsub.f32 1.0, %v326
      %v328 = vmul.f32 %v325, %v327
      %v329 = vadd.f32 %v325, %v328
      %vm330 = vweird.f32 %v324
      %vm331 = vweird.f32 %v325
      %vm332 = vmor %vm330, %vm331
      %v333 = vsel %vm332, %v325, %v329
      %v334 = vand.u32 2147483647, %v324
      %vm335 = vcmp.eq.f32.partialorder %v334, 8.507059e+37
      %v336 = vand.u32 %v324, 2147483648
      %v337 = vor.u32 1.1754944e-38, %v336
      %v338 = vsel %vm335, %v337, %v333
      %v339 = vmul.f32 1.0, %v338
      %v340 = vmul.f32 %v319, %v339
      %v341 = vld [vmem:[%s8] sm:$0xff]
      %v342 = vld [vmem:[%s8 + $0x8] sm:$0xff]
      %v343 = vld [vmem:[%s8 + $0x10] sm:$0xff]
      %v344 = vld [vmem:[%s8 + $0x18] sm:$0xff]
      %v345 = vld [vmem:[%s8 + $0x20] sm:$0xff]
      %v346 = vld [vmem:[%s8 + $0x28] sm:$0xff]
      %v347 = vld [vmem:[%s8 + $0x30] sm:$0xff]
      %v348 = vld [vmem:[%s8 + $0x38] sm:$0xff]
      %v349 = vld [vmem:[%s9] sm:$0x1]
      %v351 = vperm.slane %v349, 0
      %v354 = vsel %vm237, %v340, 0
      %356 = vmatpush.msra.mxu0 0.0
      %357 = vmatpush.msra.mxu0 0.0
      %358 = vmatpush.msra.mxu0 0.0
      %359 = vmatpush.msra.mxu0 0.0
      %360 = vmatpush.msra.mxu0 0.0
      %361 = vmatpush.msra.mxu0 0.0
      %362 = vmatpush.msra.mxu0 0.0
      %363 = vmatpush.msra.mxu0 0.0
      %364 = vmatpush.msra.mxu0 %v348
      %365 = vmatpush.msra.mxu0 %v347
      %366 = vmatpush.msra.mxu0 %v346
      %367 = vmatpush.msra.mxu0 %v345
      %368 = vmatpush.msra.mxu0 %v344
      %369 = vmatpush.msra.mxu0 %v343
      %370 = vmatpush.msra.mxu0 %v342
      %371 = vmatpush.msra.mxu0 %v341
      %372 = vmatmul.f32.gmra.mxu0 %v354
      %v373 = vpop.f32.mrf.mxu0
      %v374 = vadd.f32 %v351, %v373
      %375 = vdwg.mxu0
      %v376 = vxor.u32 %v374, 2147483648
      %v377 = vmul.f32 %v376, 1.442695
      %v378 = vpow.pop %v377
      %v379 = vadd.f32 %v378, 1.0
      %v380 = vrcp.pop %v379
      %v381 = vmul.f32 %v379, %v380
      %v382 = vsub.f32 1.0, %v381
      %v383 = vmul.f32 %v380, %v382
      %v384 = vadd.f32 %v380, %v383
      %vm385 = vweird.f32 %v379
      %vm386 = vweird.f32 %v380
      %vm387 = vmor %vm385, %vm386
      %v388 = vsel %vm387, %v380, %v384
      %v389 = vand.u32 2147483647, %v379
      %vm390 = vcmp.eq.f32.partialorder %v389, 8.507059e+37
      %v391 = vand.u32 %v379, 2147483648
      %v392 = vor.u32 1.1754944e-38, %v391
      %v393 = vsel %vm390, %v392, %v388
      %v394 = vmul.f32 1.0, %v393
      %v395 = vmul.f32 %v374, %v394
      %396 = vst [vmem:[#allocation5] sm:$0xff] %v395
      %v397 = vld [vmem:[%s10] sm:$0xff]
      %v398 = vld [vmem:[%s10 + $0x8] sm:$0xff]
      %v399 = vld [vmem:[%s11] sm:$0xff]
      %v400 = vld [vmem:[%s11 + $0x8] sm:$0xff]
      %v401 = vld [vmem:[%s11 + $0x10] sm:$0xff]
      %v402 = vld [vmem:[%s11 + $0x18] sm:$0xff]
      %v403 = vld [vmem:[%s11 + $0x20] sm:$0xff]
      %v404 = vld [vmem:[%s11 + $0x28] sm:$0xff]
      %v405 = vld [vmem:[%s11 + $0x30] sm:$0xff]
      %v406 = vld [vmem:[%s11 + $0x38] sm:$0xff]
      %v407 = vld [vmem:[%s11 + $0x40] sm:$0xff]
      %v408 = vld [vmem:[%s11 + $0x48] sm:$0xff]
      %v409 = vld [vmem:[%s11 + $0x50] sm:$0xff]
      %v410 = vld [vmem:[%s11 + $0x58] sm:$0xff]
      %v411 = vld [vmem:[%s11 + $0x60] sm:$0xff]
      %v412 = vld [vmem:[%s11 + $0x68] sm:$0xff]
      %v413 = vld [vmem:[%s11 + $0x70] sm:$0xff]
      %v414 = vld [vmem:[%s11 + $0x78] sm:$0xff]
      %415 = vmatpush.msra.mxu0 %v414
      %416 = vmatpush.msra.mxu0 %v413
      %417 = vmatpush.msra.mxu0 %v412
      %418 = vmatpush.msra.mxu0 %v411
      %419 = vmatpush.msra.mxu0 %v410
      %420 = vmatpush.msra.mxu0 %v409
      %421 = vmatpush.msra.mxu0 %v408
      %422 = vmatpush.msra.mxu0 %v407
      %423 = vmatpush.msra.mxu0 %v406
      %424 = vmatpush.msra.mxu0 %v405
      %425 = vmatpush.msra.mxu0 %v404
      %426 = vmatpush.msra.mxu0 %v403
      %427 = vmatpush.msra.mxu0 %v402
      %428 = vmatpush.msra.mxu0 %v401
      %429 = vmatpush.msra.mxu0 %v400
      %430 = vmatpush.msra.mxu0 %v399
      %431 = vmatmul.f32.gmra.mxu0 %v395
      %v432 = vpop.f32.mrf.mxu0
      %v433 = vadd.f32 0.0, %v432
      %434 = vdwg.mxu0
      %vm435 = vcmask 130048
      %v437 = vsel %vm435, %v223, 0
      %439 = vmatpush.msra.mxu0 0.0
      %440 = vmatpush.msra.mxu0 0.0
      %441 = vmatpush.msra.mxu0 0.0
      %442 = vmatpush.msra.mxu0 0.0
      %443 = vmatpush.msra.mxu0 0.0
      %444 = vmatpush.msra.mxu0 0.0
      %445 = vmatpush.msra.mxu0 0.0
      %446 = vmatpush.msra.mxu0 0.0
      %447 = vmatpush.msra.mxu0 0.0
      %448 = vmatpush.msra.mxu0 0.0
      %449 = vmatpush.msra.mxu0 0.0
      %450 = vmatpush.msra.mxu0 0.0
      %451 = vmatpush.msra.mxu0 0.0
      %452 = vmatpush.msra.mxu0 0.0
      %453 = vmatpush.msra.mxu0 %v398
      %454 = vmatpush.msra.mxu0 %v397
      %455 = vmatmul.f32.gmra.mxu0 %v437
      %v456 = vpop.f32.mrf.mxu0
      %v457 = vadd.f32 %v433, %v456
      %458 = vdwg.mxu0
      %v459 = vld [vmem:[%s12] sm:$0x1]
      %v461 = vperm.slane %v459, 0
      %v463 = vadd.f32 %v457, %v461
      %v464 = vxor.u32 %v463, 2147483648
      %v465 = vmul.f32 %v464, 1.442695
      %v466 = vpow.pop %v465
      %v467 = vadd.f32 %v466, 1.0
      %v468 = vrcp.pop %v467
      %v469 = vmul.f32 %v467, %v468
      %v470 = vsub.f32 1.0, %v469
      %v471 = vmul.f32 %v468, %v470
      %v472 = vadd.f32 %v468, %v471
      %vm473 = vweird.f32 %v467
      %vm474 = vweird.f32 %v468
      %vm475 = vmor %vm473, %vm474
      %v476 = vsel %vm475, %v468, %v472
      %v477 = vand.u32 2147483647, %v467
      %vm478 = vcmp.eq.f32.partialorder %v477, 8.507059e+37
      %v479 = vand.u32 %v467, 2147483648
      %v480 = vor.u32 1.1754944e-38, %v479
      %v481 = vsel %vm478, %v480, %v476
      %v482 = vmul.f32 1.0, %v481
      %483 = vst [vmem:[#allocation3] sm:$0xff] %v482
    $region61: #{tpu_custom_call.1} parent=1 // pred_fallthru
      _
    // Predicated region
    $region62: #{tpu_custom_call.1} parent=1 // pred_check
      _
    $region63: #{tpu_custom_call.1} parent=1 // pred_check_branch
      %485 = sbr.rel (0) target = $region65
    $region64: #{tpu_custom_call.1} parent=1 // pred_region
      %487 = vsyncadd [#allocation4], 0
      %s489 = sshll.u32 [#allocation3], 4
      %s490 = int_to_ptr.vmem [resolvable:$true] %s489
      %s491 = sshll.u32 %s13, 4
      %s492 = int_to_ptr.hbm [resolvable:$true] %s491
      %494 = dma.vmem_to_hbm [thread:$0]  %s490, 128, %s492, [#allocation4]
    $region65: #{tpu_custom_call.1} parent=1 // pred_fallthru
      _
    // Predicated region
    $region66: #{tpu_custom_call.1} parent=1 // pred_check
      _
    $region67: #{tpu_custom_call.1} parent=1 // pred_check_branch
      %496 = sbr.rel (0) target = $region69
    $region68: #{tpu_custom_call.1} parent=1 // pred_region
      %498 = vsyncadd [#allocation6], 0
      %s500 = sshll.u32 [#allocation5], 4
      %s501 = int_to_ptr.vmem [resolvable:$true] %s500
      %s502 = sshll.u32 %s14, 4
      %s503 = int_to_ptr.hbm [resolvable:$true] %s502
      %505 = dma.vmem_to_hbm [thread:$0]  %s501, 128, %s503, [#allocation6]
    $region69: #{tpu_custom_call.1} parent=1 // pred_fallthru
      _
    // Predicated region
    $region70: #{tpu_custom_call.1} parent=1 // pred_check
      _
    $region71: #{tpu_custom_call.1} parent=1 // pred_check_branch
      %507 = sbr.rel (0) target = $region73
    $region72: #{tpu_custom_call.1} parent=1 // pred_region
      %509 = dma.done [#allocation4], 128
    $region73: #{tpu_custom_call.1} parent=1 // pred_fallthru
      _
    // Predicated region
    $region74: #{tpu_custom_call.1} parent=1 // pred_check
      _
    $region75: #{tpu_custom_call.1} parent=1 // pred_check_branch
      %511 = sbr.rel (0) target = $region77
    $region76: #{tpu_custom_call.1} parent=1 // pred_region
      %513 = dma.done [#allocation6], 128
    $region77: #{tpu_custom_call.1} parent=1 // pred_fallthru
      _
    %514 = vsyncpa [#allocation4], 1
    %515 = vsyncpa [#allocation6], 1

</llo_original>
